<compile_context>
chip_gen: v7x
topology: tpu7x:2x2x1
jax: 0.10.0
libtpu: 0.0.40
codegen_flags: <defaults>
</compile_context>

<pallas_src>
import math

import jax
import jax.numpy as jnp
from jax.experimental import pallas as pl
from jax.experimental.pallas import tpu as pltpu

STATE_DIM = 2
HIDDEN = 100
ACTION_N = 1
LANE = 128
MAX_BATCH_TILE = 4096


def _round_up(n, m):
    return ((n + m - 1) // m) * m


def cem_forward_kernel(x_ref, p_ref, o_ref):
    """One batch tile of out = relu(x @ W1^T + b1) @ W2^T + b2, batch on lanes.

    x_ref: (state_dim, T)            state features on sublanes, batch on lanes
    p_ref: (hidden_p, state_dim + 2) packed params: cols [W1[:,k]..., b1(+bias row), w2(+b2)]
    o_ref: (1, T)                    lane-dense output slab
    """
    sd = x_ref.shape[0]

    # Layer 1: rank-`sd` VPU broadcast-FMA (sd == 2, unrolled at trace time).
    # (hidden_p, 1) params broadcast over lanes; (1, T) x rows broadcast over sublanes.
    h = p_ref[:, sd:sd + 1]                                   # b1 column
    for k in range(sd):
        h = h + p_ref[:, k:k + 1] * x_ref[k:k + 1, :]
    h = jnp.maximum(h, 0.0)                                   # (hidden_p, T), ReLU on VPU

    # Layer 2: VPU multiply + XLU sublane reduction.  The w2 column carries b2 at
    # the bias-trick row (where h == relu(1) == 1), so no separate bias add.
    o_ref[...] = jnp.sum(h * p_ref[:, sd + 1:sd + 2], axis=0, keepdims=True)


def pack_params(w1, b1, w2, b2):
    """Pack PyTorch-layout params into one (hidden_p, state_dim + 2) f32 slab.

    w1: (hidden, state_dim), b1: (hidden,), w2: (1, hidden), b2: (1,).
    Hidden is zero-padded to a multiple of 128 with at least one spare row kept
    for the bias trick; padded rows contribute exactly zero to the output.
    Call this once per weight update (CEM reuses weights across many forwards).
    """
    hidden, sd = w1.shape
    assert w2.shape == (ACTION_N, hidden) and b2.shape == (ACTION_N,), \
        "kernel's sublane-reduction output path assumes action_n == 1"
    hidden_p = _round_up(hidden + 1, LANE)                    # >= 1 spare row for b2
    p = jnp.zeros((hidden_p, sd + 2), jnp.float32)
    p = p.at[:hidden, :sd].set(w1.astype(jnp.float32))        # W1 columns
    p = p.at[:hidden, sd].set(b1.astype(jnp.float32))         # b1
    p = p.at[hidden, sd].set(1.0)                             # bias row -> relu(1) == 1
    p = p.at[:hidden, sd + 1].set(w2[0].astype(jnp.float32))  # w2
    p = p.at[hidden, sd + 1].set(b2[0].astype(jnp.float32))   # b2 rides the bias row
    return p


def cem_forward(x, packed_params, *, batch_tile=None):
    """x: (B, state_dim) f32, packed_params from pack_params(). Returns (B, 1) f32."""
    B, sd = x.shape
    hidden_p, n_cols = packed_params.shape
    assert n_cols == sd + 2, "packed_params does not match state_dim"

    # Batch-on-lanes: transpose once in the wrapper (layout plumbing), pad the batch
    # to a lane/tile multiple, compute, slice back.
    if batch_tile is None:
        Bp = _round_up(B, LANE)
        batch_tile = Bp if Bp <= MAX_BATCH_TILE else MAX_BATCH_TILE
    assert batch_tile % LANE == 0
    Bp = _round_up(B, batch_tile)
    xt = jnp.zeros((sd, Bp), jnp.float32).at[:, :B].set(x.T.astype(jnp.float32))

    grid = (Bp // batch_tile,)
    flops = 2 * Bp * hidden_p * (sd + 1)
    bytes_accessed = (xt.size + packed_params.size + Bp) * 4

    out = pl.pallas_call(
        cem_forward_kernel,
        out_shape=jax.ShapeDtypeStruct((1, Bp), jnp.float32),
        grid_spec=pltpu.PrefetchScalarGridSpec(
            num_scalar_prefetch=0,
            grid=grid,
            in_specs=[
                # batch tile of the (transposed) input: lane-dense, contiguous DMA
                pl.BlockSpec((sd, batch_tile), lambda i: (0, i)),
                # single packed parameter slab, resident across the grid
                pl.BlockSpec((hidden_p, n_cols), lambda i: (0, 0)),
            ],
            out_specs=pl.BlockSpec((1, batch_tile), lambda i: (0, i)),
        ),
        compiler_params=pltpu.CompilerParams(
            dimension_semantics=("parallel",)),
        cost_estimate=pl.CostEstimate(
            flops=flops, transcendentals=0, bytes_accessed=bytes_accessed),
    )(xt, packed_params)

    return out[0, :B].reshape(B, ACTION_N)


def init_params(key, state_dim=STATE_DIM, hidden=HIDDEN, action_n=ACTION_N):
    """Deterministic init mimicking nn.Linear default U(-1/sqrt(fan_in), 1/sqrt(fan_in)).
       Returns params in PyTorch layout."""
    k1, k2, k3, k4 = jax.random.split(key, 4)
    lim1 = 1.0 / math.sqrt(state_dim)
    lim2 = 1.0 / math.sqrt(hidden)
    w1 = jax.random.uniform(k1, (hidden, state_dim), jnp.float32, -lim1, lim1)
    b1 = jax.random.uniform(k2, (hidden,), jnp.float32, -lim1, lim1)
    w2 = jax.random.uniform(k3, (action_n, hidden), jnp.float32, -lim2, lim2)
    b2 = jax.random.uniform(k4, (action_n,), jnp.float32, -lim2, lim2)
    return w1, b1, w2, b2


def cem_forward_ref(x, w1, b1, w2, b2):
    h = jnp.maximum(x @ w1.T + b1, 0.0)
    return h @ w2.T + b2


if __name__ == "__main__":
    key = jax.random.PRNGKey(0)
    kx, kp = jax.random.split(key)

    batch = 32  # matches the module's self.batch_size
    x = jax.random.normal(kx, (batch, STATE_DIM), jnp.float32)
    w1, b1, w2, b2 = init_params(kp)

    packed = pack_params(w1, b1, w2, b2)   # hoisted: packed once per weight update
    out = jax.block_until_ready(cem_forward(x, packed))

    ref = cem_forward_ref(x, w1, b1, w2, b2)
    assert out.shape == (batch, ACTION_N)
    assert jnp.allclose(out, ref, atol=1e-4, rtol=1e-5), "mismatch vs reference"

    # TODO(synk): get_action's tanh(det_action + uniform noise) and the Adam/MSE
    # training loop in update_policy are host-side RL glue, not part of forward().
    print("KERNEL_OK")
</pallas_src>

<mosaic_0001>
module attributes {stable_mosaic.version = 11 : i64} {
  func.func @cem_forward_kernel(%arg0: i32, %arg1: memref<2x128xf32, #tpu.memory_space<vmem>>, %arg2: memref<128x4xf32, #tpu.memory_space<vmem>>, %arg3: memref<1x128xf32, #tpu.memory_space<vmem>>) attributes {dimension_semantics = [#tpu.dimension_semantics<parallel>], iteration_bounds = array<i64: 1>, scalar_prefetch = 0 : i64, scratch_operands = 0 : i64, tpu.core_type = #tpu.core_type<tc>, window_params = [{transform_indices = @transform_0, window_bounds = array<i64: 2, 128>}, {pipeline_mode = #tpu.pipeline_mode<synchronous>, transform_indices = @transform_1, window_bounds = array<i64: 128, 4>}, {transform_indices = @transform_2, window_bounds = array<i64: 1, 128>}]} {
    %c0 = arith.constant 0 : index
    %c2 = arith.constant 2 : index
    %0 = vector.load %arg2[%c0, %c2] : memref<128x4xf32, #tpu.memory_space<vmem>>, vector<128x1xf32>
    %c0_0 = arith.constant 0 : index
    %c0_1 = arith.constant 0 : index
    %1 = vector.load %arg2[%c0_0, %c0_1] : memref<128x4xf32, #tpu.memory_space<vmem>>, vector<128x1xf32>
    %c0_2 = arith.constant 0 : index
    %c0_3 = arith.constant 0 : index
    %2 = vector.load %arg1[%c0_2, %c0_3] : memref<2x128xf32, #tpu.memory_space<vmem>>, vector<1x128xf32>
    %3 = vector.broadcast %1 : vector<128x1xf32> to vector<128x128xf32>
    %4 = vector.broadcast %2 : vector<1x128xf32> to vector<128x128xf32>
    %5 = arith.mulf %3, %4 : vector<128x128xf32>
    %6 = vector.broadcast %0 : vector<128x1xf32> to vector<128x128xf32>
    %7 = arith.addf %6, %5 : vector<128x128xf32>
    %c0_4 = arith.constant 0 : index
    %c1 = arith.constant 1 : index
    %8 = vector.load %arg2[%c0_4, %c1] : memref<128x4xf32, #tpu.memory_space<vmem>>, vector<128x1xf32>
    %c1_5 = arith.constant 1 : index
    %c0_6 = arith.constant 0 : index
    %9 = vector.load %arg1[%c1_5, %c0_6] : memref<2x128xf32, #tpu.memory_space<vmem>>, vector<1x128xf32>
    %10 = vector.broadcast %8 : vector<128x1xf32> to vector<128x128xf32>
    %11 = vector.broadcast %9 : vector<1x128xf32> to vector<128x128xf32>
    %12 = arith.mulf %10, %11 : vector<128x128xf32>
    %13 = arith.addf %7, %12 : vector<128x128xf32>
    %cst = arith.constant 0.000000e+00 : f32
    %14 = vector.broadcast %cst : f32 to vector<128x128xf32>
    %15 = arith.maximumf %13, %14 : vector<128x128xf32>
    %c0_7 = arith.constant 0 : index
    %c3 = arith.constant 3 : index
    %16 = vector.load %arg2[%c0_7, %c3] : memref<128x4xf32, #tpu.memory_space<vmem>>, vector<128x1xf32>
    %17 = vector.broadcast %16 : vector<128x1xf32> to vector<128x128xf32>
    %18 = arith.mulf %15, %17 : vector<128x128xf32>
    %cst_8 = arith.constant dense<0.000000e+00> : vector<128xf32>
    %19 = vector.multi_reduction <add>, %18, %cst_8 [0] : vector<128x128xf32> to vector<128xf32>
    %20 = vector.shape_cast %19 : vector<128xf32> to vector<1x128xf32>
    %c0_9 = arith.constant 0 : index
    %c0_10 = arith.constant 0 : index
    %21 = vector.load %arg3[%c0_9, %c0_10] : memref<1x128xf32, #tpu.memory_space<vmem>>, vector<1x128xf32>
    tpu.vector_store %arg3[%c0_9, %c0_10], %20 {strides = array<i32>} : memref<1x128xf32, #tpu.memory_space<vmem>>, vector<1x128xf32>,
    return
  }
  func.func @transform_0(%arg0: i32) -> (i32, i32) {
    %c0_i32 = arith.constant 0 : i32
    %c0_i32_0 = arith.constant 0 : i32
    return %c0_i32, %arg0 : i32, i32
  }
  func.func @transform_1(%arg0: i32) -> (i32, i32) {
    %c0_i32 = arith.constant 0 : i32
    %c0_i32_0 = arith.constant 0 : i32
    %c0_i32_1 = arith.constant 0 : i32
    return %c0_i32, %c0_i32_0 : i32, i32
  }
  func.func @transform_2(%arg0: i32) -> (i32, i32) {
    %c0_i32 = arith.constant 0 : i32
    %c0_i32_0 = arith.constant 0 : i32
    return %c0_i32, %arg0 : i32, i32
  }
}

</mosaic_0001>

<llo_original>
// kernel: tpu_custom_call.1
$region0: #{tpu_custom_call.1}
  #allocation0 [shape = 'u32[]', space=smem, size = 0x4, offset = 0x4, fixed_abs, tag = 'smem constant byte address 0x4 - core index']
  #allocation1 [shape = 'u32[144,128]{1,0:T(1,128)}', space=vmem, size = 0x12000, scoped, tag = 'internal scratch']
  %s0 = inlined_call_operand.vmem [shape: f32[2,128], index: 0, kind: input, shape index: {}]
  %s1 = inlined_call_operand.vmem [shape: f32[128,4], index: 1, kind: input, shape index: {}]
  %s2 = inlined_call_operand.hbm [shape: f32[1,128], index: 2, kind: output, shape index: {}]
  %s3 = sld [smem:[#allocation0]]
  $region18: #{tpu_custom_call.1} parent=0
    _
  %s5 = ssub.s32 1, %s3
  %s6 = scalar_select 0, %s5, %s3
  $region1: #{tpu_custom_call.1} parent=0
    #allocation2 [shape = 'u8[512]{0}', space=vmem, size = 0x400, scoped, tag = 'output window, operand 0, single buffered']
    #allocation3 [shape = 's32[1]{0}', space=sflag, size = 0x4, scoped, tag = 'scoped memory for tpu_custom_call.1']
    %7 = vsyncpa [#allocation3], 0
    // Predicated region
    $region2: #{tpu_custom_call.1} parent=1 // pred_check
      _
    $region3: #{tpu_custom_call.1} parent=1 // pred_check_branch
      %9 = sbr.rel (0) target = $region5
    $region4: #{tpu_custom_call.1} parent=1 // pred_region
      _
    $region5: #{tpu_custom_call.1} parent=1 // pred_fallthru
      _
    // Predicated region
    $region6: #{tpu_custom_call.1} parent=1 // pred_check
      _
    $region7: #{tpu_custom_call.1} parent=1 // pred_check_branch
      %11 = sbr.rel (0) target = $region9
    $region8: #{tpu_custom_call.1} parent=1 // pred_region
      _
    $region9: #{tpu_custom_call.1} parent=1 // pred_fallthru
      _
    %v12 = vld [vmem:[%s1] sm:$0xff]
    %v13 = vld [vmem:[%s1 + $0x8] sm:$0xff]
    %v14 = vld [vmem:[%s1 + $0x10] sm:$0xff]
    %v15 = vld [vmem:[%s1 + $0x18] sm:$0xff]
    %v16 = vld [vmem:[%s1 + $0x20] sm:$0xff]
    %v17 = vld [vmem:[%s1 + $0x28] sm:$0xff]
    %v18 = vld [vmem:[%s1 + $0x30] sm:$0xff]
    %v19 = vld [vmem:[%s1 + $0x38] sm:$0xff]
    %v20 = vld [vmem:[%s1 + $0x40] sm:$0xff]
    %v21 = vld [vmem:[%s1 + $0x48] sm:$0xff]
    %v22 = vld [vmem:[%s1 + $0x50] sm:$0xff]
    %v23 = vld [vmem:[%s1 + $0x58] sm:$0xff]
    %v24 = vld [vmem:[%s1 + $0x60] sm:$0xff]
    %v25 = vld [vmem:[%s1 + $0x68] sm:$0xff]
    %v26 = vld [vmem:[%s1 + $0x70] sm:$0xff]
    %v27 = vld [vmem:[%s1 + $0x78] sm:$0xff]
    %v28 = vld [vmem:[%s0] sm:$0x1]
    %30 = vset.pattern.permute.xlu0 0
    %31 = vperm.xlu0 %30, %v12
    %v32 = vpop.permute.xlu0 %31
    %35 = vset.pattern.permute.xlu0 0
    %36 = vperm.xlu0 %35, %v13
    %v37 = vpop.permute.xlu0 %36
    %40 = vset.pattern.permute.xlu0 0
    %41 = vperm.xlu0 %40, %v14
    %v42 = vpop.permute.xlu0 %41
    %45 = vset.pattern.permute.xlu0 0
    %46 = vperm.xlu0 %45, %v15
    %v47 = vpop.permute.xlu0 %46
    %50 = vset.pattern.permute.xlu0 0
    %51 = vperm.xlu0 %50, %v16
    %v52 = vpop.permute.xlu0 %51
    %55 = vset.pattern.permute.xlu0 0
    %56 = vperm.xlu0 %55, %v17
    %v57 = vpop.permute.xlu0 %56
    %60 = vset.pattern.permute.xlu0 0
    %61 = vperm.xlu0 %60, %v18
    %v62 = vpop.permute.xlu0 %61
    %65 = vset.pattern.permute.xlu0 0
    %66 = vperm.xlu0 %65, %v19
    %v67 = vpop.permute.xlu0 %66
    %70 = vset.pattern.permute.xlu0 0
    %71 = vperm.xlu0 %70, %v20
    %v72 = vpop.permute.xlu0 %71
    %75 = vset.pattern.permute.xlu0 0
    %76 = vperm.xlu0 %75, %v21
    %v77 = vpop.permute.xlu0 %76
    %80 = vset.pattern.permute.xlu0 0
    %81 = vperm.xlu0 %80, %v22
    %v82 = vpop.permute.xlu0 %81
    %85 = vset.pattern.permute.xlu0 0
    %86 = vperm.xlu0 %85, %v23
    %v87 = vpop.permute.xlu0 %86
    %90 = vset.pattern.permute.xlu0 0
    %91 = vperm.xlu0 %90, %v24
    %v92 = vpop.permute.xlu0 %91
    %95 = vset.pattern.permute.xlu0 0
    %96 = vperm.xlu0 %95, %v25
    %v97 = vpop.permute.xlu0 %96
    %100 = vset.pattern.permute.xlu0 0
    %101 = vperm.xlu0 %100, %v26
    %v102 = vpop.permute.xlu0 %101
    %105 = vset.pattern.permute.xlu0 0
    %106 = vperm.xlu0 %105, %v27
    %v107 = vpop.permute.xlu0 %106
    %v109 = vlaneseq
    %v110 = vshrl.u32 %v109, 7
    %v111 = vsub.s32 0, %v110
    %v112 = vrot.slane %v28, %v111
    %v113 = vmul.f32 %v32, %v112
    %v114 = vmul.f32 %v37, %v112
    %v115 = vmul.f32 %v42, %v112
    %v116 = vmul.f32 %v47, %v112
    %v117 = vmul.f32 %v52, %v112
    %v118 = vmul.f32 %v57, %v112
    %v119 = vmul.f32 %v62, %v112
    %v120 = vmul.f32 %v67, %v112
    %v121 = vmul.f32 %v72, %v112
    %v122 = vmul.f32 %v77, %v112
    %v123 = vmul.f32 %v82, %v112
    %v124 = vmul.f32 %v87, %v112
    %v125 = vmul.f32 %v92, %v112
    %v126 = vmul.f32 %v97, %v112
    %v127 = vmul.f32 %v102, %v112
    %v128 = vmul.f32 %v107, %v112
    %129 = vset.pattern.permute.xlu0 2
    %130 = vperm.xlu0 %129, %v12
    %v131 = vpop.permute.xlu0 %130
    %133 = vset.pattern.permute.xlu0 2
    %134 = vperm.xlu0 %133, %v13
    %v135 = vpop.permute.xlu0 %134
    %137 = vset.pattern.permute.xlu0 2
    %138 = vperm.xlu0 %137, %v14
    %v139 = vpop.permute.xlu0 %138
    %141 = vset.pattern.permute.xlu0 2
    %142 = vperm.xlu0 %141, %v15
    %v143 = vpop.permute.xlu0 %142
    %145 = vset.pattern.permute.xlu0 2
    %146 = vperm.xlu0 %145, %v16
    %v147 = vpop.permute.xlu0 %146
    %149 = vset.pattern.permute.xlu0 2
    %150 = vperm.xlu0 %149, %v17
    %v151 = vpop.permute.xlu0 %150
    %153 = vset.pattern.permute.xlu0 2
    %154 = vperm.xlu0 %153, %v18
    %v155 = vpop.permute.xlu0 %154
    %157 = vset.pattern.permute.xlu0 2
    %158 = vperm.xlu0 %157, %v19
    %v159 = vpop.permute.xlu0 %158
    %161 = vset.pattern.permute.xlu0 2
    %162 = vperm.xlu0 %161, %v20
    %v163 = vpop.permute.xlu0 %162
    %165 = vset.pattern.permute.xlu0 2
    %166 = vperm.xlu0 %165, %v21
    %v167 = vpop.permute.xlu0 %166
    %169 = vset.pattern.permute.xlu0 2
    %170 = vperm.xlu0 %169, %v22
    %v171 = vpop.permute.xlu0 %170
    %173 = vset.pattern.permute.xlu0 2
    %174 = vperm.xlu0 %173, %v23
    %v175 = vpop.permute.xlu0 %174
    %177 = vset.pattern.permute.xlu0 2
    %178 = vperm.xlu0 %177, %v24
    %v179 = vpop.permute.xlu0 %178
    %181 = vset.pattern.permute.xlu0 2
    %182 = vperm.xlu0 %181, %v25
    %v183 = vpop.permute.xlu0 %182
    %185 = vset.pattern.permute.xlu0 2
    %186 = vperm.xlu0 %185, %v26
    %v187 = vpop.permute.xlu0 %186
    %189 = vset.pattern.permute.xlu0 2
    %190 = vperm.xlu0 %189, %v27
    %v191 = vpop.permute.xlu0 %190
    %v193 = vadd.f32 %v131, %v113
    %v194 = vadd.f32 %v135, %v114
    %v195 = vadd.f32 %v139, %v115
    %v196 = vadd.f32 %v143, %v116
    %v197 = vadd.f32 %v147, %v117
    %v198 = vadd.f32 %v151, %v118
    %v199 = vadd.f32 %v155, %v119
    %v200 = vadd.f32 %v159, %v120
    %v201 = vadd.f32 %v163, %v121
    %v202 = vadd.f32 %v167, %v122
    %v203 = vadd.f32 %v171, %v123
    %v204 = vadd.f32 %v175, %v124
    %v205 = vadd.f32 %v179, %v125
    %v206 = vadd.f32 %v183, %v126
    %v207 = vadd.f32 %v187, %v127
    %v208 = vadd.f32 %v191, %v128
    %v209 = vld [vmem:[%s0 + $0x1] sm:$0x1]
    %210 = vset.pattern.permute.xlu0 1
    %211 = vperm.xlu0 %210, %v12
    %v212 = vpop.permute.xlu0 %211
    %214 = vset.pattern.permute.xlu0 1
    %215 = vperm.xlu0 %214, %v13
    %v216 = vpop.permute.xlu0 %215
    %218 = vset.pattern.permute.xlu0 1
    %219 = vperm.xlu0 %218, %v14
    %v220 = vpop.permute.xlu0 %219
    %222 = vset.pattern.permute.xlu0 1
    %223 = vperm.xlu0 %222, %v15
    %v224 = vpop.permute.xlu0 %223
    %226 = vset.pattern.permute.xlu0 1
    %227 = vperm.xlu0 %226, %v16
    %v228 = vpop.permute.xlu0 %227
    %230 = vset.pattern.permute.xlu0 1
    %231 = vperm.xlu0 %230, %v17
    %v232 = vpop.permute.xlu0 %231
    %234 = vset.pattern.permute.xlu0 1
    %235 = vperm.xlu0 %234, %v18
    %v236 = vpop.permute.xlu0 %235
    %238 = vset.pattern.permute.xlu0 1
    %239 = vperm.xlu0 %238, %v19
    %v240 = vpop.permute.xlu0 %239
    %242 = vset.pattern.permute.xlu0 1
    %243 = vperm.xlu0 %242, %v20
    %v244 = vpop.permute.xlu0 %243
    %246 = vset.pattern.permute.xlu0 1
    %247 = vperm.xlu0 %246, %v21
    %v248 = vpop.permute.xlu0 %247
    %250 = vset.pattern.permute.xlu0 1
    %251 = vperm.xlu0 %250, %v22
    %v252 = vpop.permute.xlu0 %251
    %254 = vset.pattern.permute.xlu0 1
    %255 = vperm.xlu0 %254, %v23
    %v256 = vpop.permute.xlu0 %255
    %258 = vset.pattern.permute.xlu0 1
    %259 = vperm.xlu0 %258, %v24
    %v260 = vpop.permute.xlu0 %259
    %262 = vset.pattern.permute.xlu0 1
    %263 = vperm.xlu0 %262, %v25
    %v264 = vpop.permute.xlu0 %263
    %266 = vset.pattern.permute.xlu0 1
    %267 = vperm.xlu0 %266, %v26
    %v268 = vpop.permute.xlu0 %267
    %270 = vset.pattern.permute.xlu0 1
    %271 = vperm.xlu0 %270, %v27
    %v272 = vpop.permute.xlu0 %271
    %v274 = vlaneseq
    %v275 = vshrl.u32 %v274, 7
    %v276 = vsub.s32 0, %v275
    %v277 = vrot.slane %v209, %v276
    %v278 = vmul.f32 %v212, %v277
    %v279 = vmul.f32 %v216, %v277
    %v280 = vmul.f32 %v220, %v277
    %v281 = vmul.f32 %v224, %v277
    %v282 = vmul.f32 %v228, %v277
    %v283 = vmul.f32 %v232, %v277
    %v284 = vmul.f32 %v236, %v277
    %v285 = vmul.f32 %v240, %v277
    %v286 = vmul.f32 %v244, %v277
    %v287 = vmul.f32 %v248, %v277
    %v288 = vmul.f32 %v252, %v277
    %v289 = vmul.f32 %v256, %v277
    %v290 = vmul.f32 %v260, %v277
    %v291 = vmul.f32 %v264, %v277
    %v292 = vmul.f32 %v268, %v277
    %v293 = vmul.f32 %v272, %v277
    %v294 = vadd.f32 %v193, %v278
    %v295 = vadd.f32 %v194, %v279
    %v296 = vadd.f32 %v195, %v280
    %v297 = vadd.f32 %v196, %v281
    %v298 = vadd.f32 %v197, %v282
    %v299 = vadd.f32 %v198, %v283
    %v300 = vadd.f32 %v199, %v284
    %v301 = vadd.f32 %v200, %v285
    %v302 = vadd.f32 %v201, %v286
    %v303 = vadd.f32 %v202, %v287
    %v304 = vadd.f32 %v203, %v288
    %v305 = vadd.f32 %v204, %v289
    %v306 = vadd.f32 %v205, %v290
    %v307 = vadd.f32 %v206, %v291
    %v308 = vadd.f32 %v207, %v292
    %v309 = vadd.f32 %v208, %v293
    %v310 = vmax.f32 %v294, 0.0
    %v311 = vmax.f32 %v295, 0.0
    %v312 = vmax.f32 %v296, 0.0
    %v313 = vmax.f32 %v297, 0.0
    %v314 = vmax.f32 %v298, 0.0
    %v315 = vmax.f32 %v299, 0.0
    %v316 = vmax.f32 %v300, 0.0
    %v317 = vmax.f32 %v301, 0.0
    %v318 = vmax.f32 %v302, 0.0
    %v319 = vmax.f32 %v303, 0.0
    %v320 = vmax.f32 %v304, 0.0
    %v321 = vmax.f32 %v305, 0.0
    %v322 = vmax.f32 %v306, 0.0
    %v323 = vmax.f32 %v307, 0.0
    %v324 = vmax.f32 %v308, 0.0
    %v325 = vmax.f32 %v309, 0.0
    %326 = vset.pattern.permute.xlu0 3
    %327 = vperm.xlu0 %326, %v12
    %v328 = vpop.permute.xlu0 %327
    %330 = vset.pattern.permute.xlu0 3
    %331 = vperm.xlu0 %330, %v13
    %v332 = vpop.permute.xlu0 %331
    %334 = vset.pattern.permute.xlu0 3
    %335 = vperm.xlu0 %334, %v14
    %v336 = vpop.permute.xlu0 %335
    %338 = vset.pattern.permute.xlu0 3
    %339 = vperm.xlu0 %338, %v15
    %v340 = vpop.permute.xlu0 %339
    %342 = vset.pattern.permute.xlu0 3
    %343 = vperm.xlu0 %342, %v16
    %v344 = vpop.permute.xlu0 %343
    %346 = vset.pattern.permute.xlu0 3
    %347 = vperm.xlu0 %346, %v17
    %v348 = vpop.permute.xlu0 %347
    %350 = vset.pattern.permute.xlu0 3
    %351 = vperm.xlu0 %350, %v18
    %v352 = vpop.permute.xlu0 %351
    %354 = vset.pattern.permute.xlu0 3
    %355 = vperm.xlu0 %354, %v19
    %v356 = vpop.permute.xlu0 %355
    %358 = vset.pattern.permute.xlu0 3
    %359 = vperm.xlu0 %358, %v20
    %v360 = vpop.permute.xlu0 %359
    %362 = vset.pattern.permute.xlu0 3
    %363 = vperm.xlu0 %362, %v21
    %v364 = vpop.permute.xlu0 %363
    %366 = vset.pattern.permute.xlu0 3
    %367 = vperm.xlu0 %366, %v22
    %v368 = vpop.permute.xlu0 %367
    %370 = vset.pattern.permute.xlu0 3
    %371 = vperm.xlu0 %370, %v23
    %v372 = vpop.permute.xlu0 %371
    %374 = vset.pattern.permute.xlu0 3
    %375 = vperm.xlu0 %374, %v24
    %v376 = vpop.permute.xlu0 %375
    %378 = vset.pattern.permute.xlu0 3
    %379 = vperm.xlu0 %378, %v25
    %v380 = vpop.permute.xlu0 %379
    %382 = vset.pattern.permute.xlu0 3
    %383 = vperm.xlu0 %382, %v26
    %v384 = vpop.permute.xlu0 %383
    %386 = vset.pattern.permute.xlu0 3
    %387 = vperm.xlu0 %386, %v27
    %v388 = vpop.permute.xlu0 %387
    %v390 = vmul.f32 %v310, %v328
    %v391 = vmul.f32 %v311, %v332
    %v392 = vmul.f32 %v312, %v336
    %v393 = vmul.f32 %v313, %v340
    %v394 = vmul.f32 %v314, %v344
    %v395 = vmul.f32 %v315, %v348
    %v396 = vmul.f32 %v316, %v352
    %v397 = vmul.f32 %v317, %v356
    %v398 = vmul.f32 %v318, %v360
    %v399 = vmul.f32 %v319, %v364
    %v400 = vmul.f32 %v320, %v368
    %v401 = vmul.f32 %v321, %v372
    %v402 = vmul.f32 %v322, %v376
    %v403 = vmul.f32 %v323, %v380
    %v404 = vmul.f32 %v324, %v384
    %v405 = vmul.f32 %v325, %v388
    %v406 = vadd.f32 %v390, %v391
    %v407 = vadd.f32 %v406, %v392
    %v408 = vadd.f32 %v407, %v393
    %v409 = vadd.f32 %v408, %v394
    %v410 = vadd.f32 %v409, %v395
    %v411 = vadd.f32 %v410, %v396
    %v412 = vadd.f32 %v411, %v397
    %v413 = vadd.f32 %v412, %v398
    %v414 = vadd.f32 %v413, %v399
    %v415 = vadd.f32 %v414, %v400
    %v416 = vadd.f32 %v415, %v401
    %v417 = vadd.f32 %v416, %v402
    %v418 = vadd.f32 %v417, %v403
    %v419 = vadd.f32 %v418, %v404
    %v420 = vadd.f32 %v419, %v405
    %v421 = vrot.slane %v420, 4
    %v422 = vadd.f32 %v420, %v421
    %v423 = vrot.slane %v422, 2
    %v424 = vadd.f32 %v422, %v423
    %v425 = vrot.slane %v424, 1
    %v426 = vadd.f32 %v424, %v425
    %427 = vst [vmem:[#allocation2] sm:$0x1] %v426
    // Predicated region
    $region10: #{tpu_custom_call.1} parent=1 // pred_check
      _
    $region11: #{tpu_custom_call.1} parent=1 // pred_check_branch
      %429 = sbr.rel (0) target = $region13
    $region12: #{tpu_custom_call.1} parent=1 // pred_region
      %s431 = ssub.s32 16, 16
      %432 = vsyncadd [#allocation3], %s431
      %s434 = sshll.u32 [#allocation2], 4
      %s435 = int_to_ptr.vmem [resolvable:$true] %s434
      %437 = dma.vmem_to_hbm [thread:$0]  %s435, 16, %s2, [#allocation3]
    $region13: #{tpu_custom_call.1} parent=1 // pred_fallthru
      _
    // Predicated region
    $region14: #{tpu_custom_call.1} parent=1 // pred_check
      _
    $region15: #{tpu_custom_call.1} parent=1 // pred_check_branch
      %439 = sbr.rel (0) target = $region17
    $region16: #{tpu_custom_call.1} parent=1 // pred_region
      %440 = dma.done [#allocation3], 16
    $region17: #{tpu_custom_call.1} parent=1 // pred_fallthru
      _
    %441 = vsyncpa [#allocation3], 1

</llo_original>
